<compile_context>
chip_gen: v7x
topology: tpu7x:2x2x1
jax: 0.10.0
libtpu: 0.0.40
codegen_flags: <defaults>
</compile_context>

<pallas_src>
import functools

import jax
import jax.numpy as jnp
from jax import lax
from jax.experimental import pallas as pl
from jax.experimental.pallas import tpu as pltpu

LANES = 128
GROUP_ROWS = 8            # one (8, 128) f32 vreg per inner-loop step
MAX_TILE_ROWS = 2048      # (2048, 128) f32 = 1 MiB per input block


def _tensorcores_per_chip() -> int:
    """2 on v7x (2 TensorCores/chip), else 1.  Best-effort device-kind sniff."""
    try:
        kind = jax.devices()[0].device_kind.lower()
    except Exception:
        return 1
    return 2 if "v7" in kind else 1


def _combo_kernel(x_ref, t_ref, out_ref, *, alpha, eps, n_valid, binary_targets):
    """Accumulate partial sums into the resident out_ref block (1, NS, 8, 128).

    Streams, general path (NS=4):  x*t, x, t, ce
    Streams, binary path  (NS=5):  x*t, x, t, t*log(sel), (1-t)*log(sel)
    All contributions from elements with flat index >= n_valid are masked to
    exactly zero (covers partial edge tiles, overhang tiles and lane padding).
    """
    c = pl.program_id(0)
    i = pl.program_id(1)

    @pl.when(i == 0)
    def _():
        out_ref[...] = jnp.zeros_like(out_ref)

    tile_rows = x_ref.shape[0]
    groups = tile_rows // GROUP_ROWS
    nstreams = out_ref.shape[1]

    # Global flat-element offset of this tile.  For overhang tiles (index map
    # clamps the DMA, but this offset is un-clamped) valid <= 0 below, so the
    # whole tile contributes exactly zero.
    tile_idx = c * pl.num_programs(1) + i
    tile_start = tile_idx * (tile_rows * LANES)

    # Constant flat index of each element within one (8, 128) group.
    idx = (lax.broadcasted_iota(jnp.int32, (GROUP_ROWS, LANES), 0) * LANES
           + lax.broadcasted_iota(jnp.int32, (GROUP_ROWS, LANES), 1))

    def body(g, acc):
        r0 = pl.multiple_of(g * GROUP_ROWS, GROUP_ROWS)
        x = x_ref[pl.ds(r0, GROUP_ROWS), :].astype(jnp.float32)
        t = t_ref[pl.ds(r0, GROUP_ROWS), :].astype(jnp.float32)

        valid = n_valid - tile_start - r0 * LANES          # scalar, may be <= 0
        mask = idx < valid
        x = jnp.where(mask, x, 0.0)
        t = jnp.where(mask, t, 0.0)

        xc = jnp.clip(x, eps, 1.0 - eps)
        if binary_targets:
            # One transcendental per element (exact for hard {0,1} targets).
            sel = jnp.where(t > 0.5, xc, 1.0 - xc)
            logv = jnp.where(mask, jnp.log(sel), 0.0)
            new = (x * t, x, t, t * logv, (1.0 - t) * logv)
        else:
            ce = -(alpha * (t * jnp.log(xc))
                   + (1.0 - alpha) * (1.0 - t) * jnp.log(1.0 - xc))
            ce = jnp.where(mask, ce, 0.0)
            new = (x * t, x, t, ce)
        return tuple(a + v for a, v in zip(acc, new))

    zeros = jnp.zeros((GROUP_ROWS, LANES), jnp.float32)
    acc = lax.fori_loop(0, groups, body, (zeros,) * nstreams,
                        unroll=min(8, groups))

    for k in range(nstreams):
        out_ref[0, k, :, :] += acc[k]


def combo_loss(inputs, targets, *, smoothing=0.1, alpha=0.5, ce_ratio=0.5,
               eps=1e-6, binary_targets=False):
    """ComboLoss forward (matches the PyTorch reference).

    inputs/targets may be any float/int dtype (e.g. bf16 inputs, int8/bf16
    targets); they are widened to f32 inside the kernel, never in the wrapper.
    Set binary_targets=True only when targets are hard {0,1} labels (single-log
    fast path); the default keeps exact soft-label semantics.
    """
    x = jnp.reshape(inputs, (-1,))
    t = jnp.reshape(targets, (-1,))
    n = x.shape[0]

    # Only pad (one copy) when n is not a multiple of 8*128; the tile-grid
    # raggedness itself is handled in-kernel by element masking, so common
    # segmentation shapes take a zero-copy path.
    # TODO(synk): a 1-D-block kernel path would remove this last pad copy too.
    padded_n = -(-n // (8 * LANES)) * (8 * LANES)
    if padded_n != n:
        x = jnp.pad(x, (0, padded_n - n))
        t = jnp.pad(t, (0, padded_n - n))
    rows = padded_n // LANES
    x = x.reshape(rows, LANES)
    t = t.reshape(rows, LANES)

    tile_rows = min(MAX_TILE_ROWS, rows)          # rows is a multiple of 8
    n_tiles = -(-rows // tile_rows)
    num_cores = _tensorcores_per_chip()
    if n_tiles < 2:
        num_cores = 1
    tiles_per_core = -(-n_tiles // num_cores)
    nstreams = 5 if binary_targets else 4

    def in_map(c, i):
        # Clamp overhang grid steps onto the last real tile; the kernel masks
        # their contribution to zero via the element-count check.
        return (jnp.minimum(c * tiles_per_core + i, n_tiles - 1), 0)

    kernel = functools.partial(
        _combo_kernel, alpha=float(alpha), eps=float(eps), n_valid=n,
        binary_targets=bool(binary_targets))

    if num_cores == 2:
        dim_sem = (pltpu.CORE_PARALLEL, pltpu.ARBITRARY)   # v7x: real 2-TC split
    else:
        dim_sem = ("arbitrary", "arbitrary")

    partials = pl.pallas_call(
        kernel,
        out_shape=jax.ShapeDtypeStruct((num_cores, nstreams, 8, LANES),
                                       jnp.float32),
        grid_spec=pltpu.PrefetchScalarGridSpec(
            num_scalar_prefetch=0,
            grid=(num_cores, tiles_per_core),
            in_specs=[
                pl.BlockSpec((tile_rows, LANES), in_map),
                pl.BlockSpec((tile_rows, LANES), in_map),
            ],
            out_specs=pl.BlockSpec((1, nstreams, 8, LANES),
                                   lambda c, i: (c, 0, 0, 0)),
        ),
        compiler_params=pltpu.CompilerParams(dimension_semantics=dim_sem),
    )(x, t)

    # --- tiny finalize in plain JAX --------------------------------------
    sums = jnp.sum(partials, axis=(0, 2, 3))      # (nstreams,)
    s_xt, s_x, s_t = sums[0], sums[1], sums[2]
    dice = (2.0 * s_xt + smoothing) / (s_x + s_t + smoothing)
    if binary_targets:
        weighted_ce = -(alpha * sums[3] + (1.0 - alpha) * sums[4]) / n
    else:
        weighted_ce = sums[3] / n
    return ce_ratio * weighted_ce - (1.0 - ce_ratio) * dice


def combo_loss_ref(inputs, targets, *, smoothing=0.1, alpha=0.5, ce_ratio=0.5,
                   eps=1e-6):
    x = jnp.reshape(inputs, (-1,)).astype(jnp.float32)
    t = jnp.reshape(targets, (-1,)).astype(jnp.float32)
    intersection = jnp.sum(x * t)
    dice = (2.0 * intersection + smoothing) / (jnp.sum(x) + jnp.sum(t) + smoothing)
    xc = jnp.clip(x, eps, 1.0 - eps)
    out = -(alpha * (t * jnp.log(xc)) + (1.0 - alpha) * (1.0 - t) * jnp.log(1.0 - xc))
    weighted_ce = jnp.mean(out)
    return ce_ratio * weighted_ce - (1.0 - ce_ratio) * dice


if __name__ == "__main__":
    base = jax.random.PRNGKey(0)
    cases = [
        ((2, 4, 16, 16), jnp.float32),   # lane/sublane aligned -> zero-copy path
        ((1, 3, 25, 25), jnp.float32),   # ragged n -> in-kernel masking path
        ((2, 4, 16, 16), jnp.bfloat16),  # compact input dtype widened in-kernel
    ]
    for idx, (shape, dt) in enumerate(cases):
        k1, k2 = jax.random.split(jax.random.fold_in(base, idx))
        inputs = jax.nn.sigmoid(
            jax.random.normal(k1, shape, dtype=jnp.float32)).astype(dt)
        targets = (jax.random.uniform(k2, shape) > 0.5).astype(jnp.float32)

        expected = combo_loss_ref(inputs.astype(jnp.float32), targets)

        got = jax.block_until_ready(combo_loss(inputs, targets))
        assert jnp.allclose(got, expected, rtol=1e-5, atol=1e-5), \
            (shape, dt, got, expected)

        got_bin = jax.block_until_ready(
            combo_loss(inputs, targets, binary_targets=True))
        assert jnp.allclose(got_bin, expected, rtol=1e-5, atol=1e-5), \
            (shape, dt, got_bin, expected)

    print("KERNEL_OK")
</pallas_src>

<mosaic_0001>
module attributes {stable_mosaic.version = 11 : i64} {
  func.func @_combo_kernel(%arg0: i32, %arg1: i32, %arg2: memref<16x128xf32, #tpu.memory_space<vmem>>, %arg3: memref<16x128xf32, #tpu.memory_space<vmem>>, %arg4: memref<1x4x8x128xf32, #tpu.memory_space<vmem>>) attributes {dimension_semantics = [#tpu.dimension_semantics<arbitrary>, #tpu.dimension_semantics<arbitrary>], iteration_bounds = array<i64: 1, 1>, scalar_prefetch = 0 : i64, scratch_operands = 0 : i64, tpu.core_type = #tpu.core_type<tc>, window_params = [{transform_indices = @transform_0, window_bounds = array<i64: 16, 128>}, {transform_indices = @transform_1, window_bounds = array<i64: 16, 128>}, {transform_indices = @transform_2, window_bounds = array<i64: 1, 4, 8, 128>}]} {
    %c0_i32 = arith.constant 0 : i32
    %0 = arith.cmpi eq, %arg1, %c0_i32 : i32
    %1 = arith.extui %0 : i1 to i32
    %c0_i32_0 = arith.constant 0 : i32
    %2 = arith.cmpi ne, %1, %c0_i32_0 : i32
    scf.if %2 {
      %cst_60 = arith.constant 0.000000e+00 : f32
      %118 = vector.broadcast %cst_60 : f32 to vector<1x4x8x128xf32>
      %c0_61 = arith.constant 0 : index
      %c0_62 = arith.constant 0 : index
      %c0_63 = arith.constant 0 : index
      %c0_64 = arith.constant 0 : index
      %119 = vector.load %arg4[%c0_61, %c0_62, %c0_63, %c0_64] : memref<1x4x8x128xf32, #tpu.memory_space<vmem>>, vector<1x4x8x128xf32>
      tpu.vector_store %arg4[%c0_61, %c0_62, %c0_63, %c0_64], %118 {strides = array<i32>} : memref<1x4x8x128xf32, #tpu.memory_space<vmem>>, vector<1x4x8x128xf32>,
    } else {
    }
    %c1_i32 = arith.constant 1 : i32
    %3 = arith.muli %arg0, %c1_i32 : i32
    %4 = arith.addi %3, %arg1 : i32
    %c2048_i32 = arith.constant 2048 : i32
    %5 = arith.muli %4, %c2048_i32 : i32
    %6 = tpu.iota {dimensions = array<i32: 0>} : vector<8x128xi32>
    %c128_i32 = arith.constant 128 : i32
    %7 = vector.broadcast %c128_i32 : i32 to vector<8x128xi32>
    %8 = arith.muli %6, %7 : vector<8x128xi32>
    %9 = tpu.iota {dimensions = array<i32: 1>} : vector<8x128xi32>
    %10 = arith.addi %8, %9 : vector<8x128xi32>
    %cst = arith.constant 0.000000e+00 : f32
    %11 = vector.broadcast %cst : f32 to vector<8x128xf32>
    %c0_i32_1 = arith.constant 0 : i32
    %c8_i32 = arith.constant 8 : i32
    %12 = arith.muli %c0_i32_1, %c8_i32 : i32
    %13 = tpu.assume_multiple %12, 8 : i32
    %14 = arith.index_cast %13 : i32 to index
    %c0 = arith.constant 0 : index
    %15 = vector.load %arg2[%14, %c0] : memref<16x128xf32, #tpu.memory_space<vmem>>, vector<8x128xf32>
    %16 = arith.index_cast %13 : i32 to index
    %c0_2 = arith.constant 0 : index
    %17 = vector.load %arg3[%16, %c0_2] : memref<16x128xf32, #tpu.memory_space<vmem>>, vector<8x128xf32>
    %c2048_i32_3 = arith.constant 2048 : i32
    %18 = arith.subi %c2048_i32_3, %5 : i32
    %c128_i32_4 = arith.constant 128 : i32
    %19 = arith.muli %13, %c128_i32_4 : i32
    %20 = arith.subi %18, %19 : i32
    %21 = vector.broadcast %20 : i32 to vector<8x128xi32>
    %22 = arith.cmpi slt, %10, %21 : vector<8x128xi32>
    %cst_5 = arith.constant 0.000000e+00 : f32
    %23 = vector.broadcast %cst_5 : f32 to vector<8x128xf32>
    %24 = arith.select %22, %15, %23 : vector<8x128xi1>, vector<8x128xf32>
    %cst_6 = arith.constant 0.000000e+00 : f32
    %25 = vector.broadcast %cst_6 : f32 to vector<8x128xf32>
    %26 = arith.select %22, %17, %25 : vector<8x128xi1>, vector<8x128xf32>
    %cst_7 = arith.constant 9.99999997E-7 : f32
    %cst_8 = arith.constant 0.999998986 : f32
    %27 = vector.broadcast %cst_7 : f32 to vector<8x128xf32>
    %28 = arith.maximumf %27, %24 : vector<8x128xf32>
    %29 = vector.broadcast %cst_8 : f32 to vector<8x128xf32>
    %30 = arith.minimumf %29, %28 : vector<8x128xf32>
    %31 = math.log %30 : vector<8x128xf32>
    %32 = arith.mulf %26, %31 : vector<8x128xf32>
    %cst_9 = arith.constant 5.000000e-01 : f32
    %33 = vector.broadcast %cst_9 : f32 to vector<8x128xf32>
    %34 = arith.mulf %33, %32 : vector<8x128xf32>
    %cst_10 = arith.constant 1.000000e+00 : f32
    %35 = vector.broadcast %cst_10 : f32 to vector<8x128xf32>
    %36 = arith.subf %35, %26 : vector<8x128xf32>
    %cst_11 = arith.constant 5.000000e-01 : f32
    %37 = vector.broadcast %cst_11 : f32 to vector<8x128xf32>
    %38 = arith.mulf %37, %36 : vector<8x128xf32>
    %cst_12 = arith.constant 1.000000e+00 : f32
    %39 = vector.broadcast %cst_12 : f32 to vector<8x128xf32>
    %40 = arith.subf %39, %30 : vector<8x128xf32>
    %41 = math.log %40 : vector<8x128xf32>
    %42 = arith.mulf %38, %41 : vector<8x128xf32>
    %43 = arith.addf %34, %42 : vector<8x128xf32>
    %cst_13 = arith.constant 0.000000e+00 : f32
    %44 = vector.broadcast %cst_13 : f32 to vector<8x128xf32>
    %45 = arith.subf %44, %43 : vector<8x128xf32>
    %cst_14 = arith.constant 0.000000e+00 : f32
    %46 = vector.broadcast %cst_14 : f32 to vector<8x128xf32>
    %47 = arith.select %22, %45, %46 : vector<8x128xi1>, vector<8x128xf32>
    %48 = arith.mulf %24, %26 : vector<8x128xf32>
    %49 = arith.addf %11, %48 : vector<8x128xf32>
    %50 = arith.addf %11, %24 : vector<8x128xf32>
    %51 = arith.addf %11, %26 : vector<8x128xf32>
    %52 = arith.addf %11, %47 : vector<8x128xf32>
    %c1_i32_15 = arith.constant 1 : i32
    %c8_i32_16 = arith.constant 8 : i32
    %53 = arith.muli %c1_i32_15, %c8_i32_16 : i32
    %54 = tpu.assume_multiple %53, 8 : i32
    %55 = arith.index_cast %54 : i32 to index
    %c0_17 = arith.constant 0 : index
    %56 = vector.load %arg2[%55, %c0_17] : memref<16x128xf32, #tpu.memory_space<vmem>>, vector<8x128xf32>
    %57 = arith.index_cast %54 : i32 to index
    %c0_18 = arith.constant 0 : index
    %58 = vector.load %arg3[%57, %c0_18] : memref<16x128xf32, #tpu.memory_space<vmem>>, vector<8x128xf32>
    %c2048_i32_19 = arith.constant 2048 : i32
    %59 = arith.subi %c2048_i32_19, %5 : i32
    %c128_i32_20 = arith.constant 128 : i32
    %60 = arith.muli %54, %c128_i32_20 : i32
    %61 = arith.subi %59, %60 : i32
    %62 = vector.broadcast %61 : i32 to vector<8x128xi32>
    %63 = arith.cmpi slt, %10, %62 : vector<8x128xi32>
    %cst_21 = arith.constant 0.000000e+00 : f32
    %64 = vector.broadcast %cst_21 : f32 to vector<8x128xf32>
    %65 = arith.select %63, %56, %64 : vector<8x128xi1>, vector<8x128xf32>
    %cst_22 = arith.constant 0.000000e+00 : f32
    %66 = vector.broadcast %cst_22 : f32 to vector<8x128xf32>
    %67 = arith.select %63, %58, %66 : vector<8x128xi1>, vector<8x128xf32>
    %cst_23 = arith.constant 9.99999997E-7 : f32
    %cst_24 = arith.constant 0.999998986 : f32
    %68 = vector.broadcast %cst_23 : f32 to vector<8x128xf32>
    %69 = arith.maximumf %68, %65 : vector<8x128xf32>
    %70 = vector.broadcast %cst_24 : f32 to vector<8x128xf32>
    %71 = arith.minimumf %70, %69 : vector<8x128xf32>
    %72 = math.log %71 : vector<8x128xf32>
    %73 = arith.mulf %67, %72 : vector<8x128xf32>
    %cst_25 = arith.constant 5.000000e-01 : f32
    %74 = vector.broadcast %cst_25 : f32 to vector<8x128xf32>
    %75 = arith.mulf %74, %73 : vector<8x128xf32>
    %cst_26 = arith.constant 1.000000e+00 : f32
    %76 = vector.broadcast %cst_26 : f32 to vector<8x128xf32>
    %77 = arith.subf %76, %67 : vector<8x128xf32>
    %cst_27 = arith.constant 5.000000e-01 : f32
    %78 = vector.broadcast %cst_27 : f32 to vector<8x128xf32>
    %79 = arith.mulf %78, %77 : vector<8x128xf32>
    %cst_28 = arith.constant 1.000000e+00 : f32
    %80 = vector.broadcast %cst_28 : f32 to vector<8x128xf32>
    %81 = arith.subf %80, %71 : vector<8x128xf32>
    %82 = math.log %81 : vector<8x128xf32>
    %83 = arith.mulf %79, %82 : vector<8x128xf32>
    %84 = arith.addf %75, %83 : vector<8x128xf32>
    %cst_29 = arith.constant 0.000000e+00 : f32
    %85 = vector.broadcast %cst_29 : f32 to vector<8x128xf32>
    %86 = arith.subf %85, %84 : vector<8x128xf32>
    %cst_30 = arith.constant 0.000000e+00 : f32
    %87 = vector.broadcast %cst_30 : f32 to vector<8x128xf32>
    %88 = arith.select %63, %86, %87 : vector<8x128xi1>, vector<8x128xf32>
    %89 = arith.mulf %65, %67 : vector<8x128xf32>
    %90 = arith.addf %49, %89 : vector<8x128xf32>
    %91 = arith.addf %50, %65 : vector<8x128xf32>
    %92 = arith.addf %51, %67 : vector<8x128xf32>
    %93 = arith.addf %52, %88 : vector<8x128xf32>
    %c2_i32 = arith.constant 2 : i32
    %c0_31 = arith.constant 0 : index
    %c0_32 = arith.constant 0 : index
    %c0_33 = arith.constant 0 : index
    %c0_34 = arith.constant 0 : index
    %94 = vector.load %arg4[%c0_31, %c0_32, %c0_33, %c0_34] : memref<1x4x8x128xf32, #tpu.memory_space<vmem>>, vector<1x1x8x128xf32>
    %95 = vector.shape_cast %94 : vector<1x1x8x128xf32> to vector<8x128xf32>
    %96 = arith.addf %95, %90 : vector<8x128xf32>
    %c0_35 = arith.constant 0 : index
    %c0_36 = arith.constant 0 : index
    %c0_37 = arith.constant 0 : index
    %c0_38 = arith.constant 0 : index
    %97 = vector.load %arg4[%c0_35, %c0_36, %c0_37, %c0_38] : memref<1x4x8x128xf32, #tpu.memory_space<vmem>>, vector<1x1x8x128xf32>
    %98 = vector.shape_cast %97 : vector<1x1x8x128xf32> to vector<8x128xf32>
    %99 = vector.shape_cast %96 : vector<8x128xf32> to vector<1x1x8x128xf32>
    tpu.vector_store %arg4[%c0_35, %c0_36, %c0_37, %c0_38], %99 {strides = array<i32>} : memref<1x4x8x128xf32, #tpu.memory_space<vmem>>, vector<1x1x8x128xf32>,
    %c0_39 = arith.constant 0 : index
    %c1 = arith.constant 1 : index
    %c0_40 = arith.constant 0 : index
    %c0_41 = arith.constant 0 : index
    %100 = vector.load %arg4[%c0_39, %c1, %c0_40, %c0_41] : memref<1x4x8x128xf32, #tpu.memory_space<vmem>>, vector<1x1x8x128xf32>
    %101 = vector.shape_cast %100 : vector<1x1x8x128xf32> to vector<8x128xf32>
    %102 = arith.addf %101, %91 : vector<8x128xf32>
    %c0_42 = arith.constant 0 : index
    %c1_43 = arith.constant 1 : index
    %c0_44 = arith.constant 0 : index
    %c0_45 = arith.constant 0 : index
    %103 = vector.load %arg4[%c0_42, %c1_43, %c0_44, %c0_45] : memref<1x4x8x128xf32, #tpu.memory_space<vmem>>, vector<1x1x8x128xf32>
    %104 = vector.shape_cast %103 : vector<1x1x8x128xf32> to vector<8x128xf32>
    %105 = vector.shape_cast %102 : vector<8x128xf32> to vector<1x1x8x128xf32>
    tpu.vector_store %arg4[%c0_42, %c1_43, %c0_44, %c0_45], %105 {strides = array<i32>} : memref<1x4x8x128xf32, #tpu.memory_space<vmem>>, vector<1x1x8x128xf32>,
    %c0_46 = arith.constant 0 : index
    %c2 = arith.constant 2 : index
    %c0_47 = arith.constant 0 : index
    %c0_48 = arith.constant 0 : index
    %106 = vector.load %arg4[%c0_46, %c2, %c0_47, %c0_48] : memref<1x4x8x128xf32, #tpu.memory_space<vmem>>, vector<1x1x8x128xf32>
    %107 = vector.shape_cast %106 : vector<1x1x8x128xf32> to vector<8x128xf32>
    %108 = arith.addf %107, %92 : vector<8x128xf32>
    %c0_49 = arith.constant 0 : index
    %c2_50 = arith.constant 2 : index
    %c0_51 = arith.constant 0 : index
    %c0_52 = arith.constant 0 : index
    %109 = vector.load %arg4[%c0_49, %c2_50, %c0_51, %c0_52] : memref<1x4x8x128xf32, #tpu.memory_space<vmem>>, vector<1x1x8x128xf32>
    %110 = vector.shape_cast %109 : vector<1x1x8x128xf32> to vector<8x128xf32>
    %111 = vector.shape_cast %108 : vector<8x128xf32> to vector<1x1x8x128xf32>
    tpu.vector_store %arg4[%c0_49, %c2_50, %c0_51, %c0_52], %111 {strides = array<i32>} : memref<1x4x8x128xf32, #tpu.memory_space<vmem>>, vector<1x1x8x128xf32>,
    %c0_53 = arith.constant 0 : index
    %c3 = arith.constant 3 : index
    %c0_54 = arith.constant 0 : index
    %c0_55 = arith.constant 0 : index
    %112 = vector.load %arg4[%c0_53, %c3, %c0_54, %c0_55] : memref<1x4x8x128xf32, #tpu.memory_space<vmem>>, vector<1x1x8x128xf32>
    %113 = vector.shape_cast %112 : vector<1x1x8x128xf32> to vector<8x128xf32>
    %114 = arith.addf %113, %93 : vector<8x128xf32>
    %c0_56 = arith.constant 0 : index
    %c3_57 = arith.constant 3 : index
    %c0_58 = arith.constant 0 : index
    %c0_59 = arith.constant 0 : index
    %115 = vector.load %arg4[%c0_56, %c3_57, %c0_58, %c0_59] : memref<1x4x8x128xf32, #tpu.memory_space<vmem>>, vector<1x1x8x128xf32>
    %116 = vector.shape_cast %115 : vector<1x1x8x128xf32> to vector<8x128xf32>
    %117 = vector.shape_cast %114 : vector<8x128xf32> to vector<1x1x8x128xf32>
    tpu.vector_store %arg4[%c0_56, %c3_57, %c0_58, %c0_59], %117 {strides = array<i32>} : memref<1x4x8x128xf32, #tpu.memory_space<vmem>>, vector<1x1x8x128xf32>,
    return
  }
  func.func @transform_0(%arg0: i32, %arg1: i32) -> (i32, i32) {
    %c1_i32 = arith.constant 1 : i32
    %0 = arith.muli %arg0, %c1_i32 : i32
    %1 = arith.addi %0, %arg1 : i32
    %c0_i32 = arith.constant 0 : i32
    %2 = arith.minsi %1, %c0_i32 : i32
    %c0_i32_0 = arith.constant 0 : i32
    %c0_i32_1 = arith.constant 0 : i32
    return %2, %c0_i32_0 : i32, i32
  }
  func.func @transform_1(%arg0: i32, %arg1: i32) -> (i32, i32) {
    %c1_i32 = arith.constant 1 : i32
    %0 = arith.muli %arg0, %c1_i32 : i32
    %1 = arith.addi %0, %arg1 : i32
    %c0_i32 = arith.constant 0 : i32
    %2 = arith.minsi %1, %c0_i32 : i32
    %c0_i32_0 = arith.constant 0 : i32
    %c0_i32_1 = arith.constant 0 : i32
    return %2, %c0_i32_0 : i32, i32
  }
  func.func @transform_2(%arg0: i32, %arg1: i32) -> (i32, i32, i32, i32) {
    %c0_i32 = arith.constant 0 : i32
    %c0_i32_0 = arith.constant 0 : i32
    %c0_i32_1 = arith.constant 0 : i32
    %c0_i32_2 = arith.constant 0 : i32
    return %arg0, %c0_i32, %c0_i32_0, %c0_i32_1 : i32, i32, i32, i32
  }
}

</mosaic_0001>

<llo_original>
// kernel: tpu_custom_call.1
$region0: #{tpu_custom_call.1}
  #allocation0 [shape = 'u32[]', space=smem, size = 0x4, offset = 0x4, fixed_abs, tag = 'smem constant byte address 0x4 - core index']
  #allocation1 [shape = 'u32[144,128]{1,0:T(1,128)}', space=vmem, size = 0x12000, scoped, tag = 'internal scratch']
  %s0 = inlined_call_operand.hbm [shape: f32[16,128], index: 0, kind: input, shape index: {}]
  %s1 = inlined_call_operand.hbm [shape: f32[16,128], index: 1, kind: input, shape index: {}]
  %s2 = inlined_call_operand.hbm [shape: f32[1,4,8,128], index: 2, kind: output, shape index: {}]
  %s3 = sld [smem:[#allocation0]]
  $region30: #{tpu_custom_call.1} parent=0
    _
  %s5 = ssub.s32 1, %s3
  %s6 = scalar_select 0, %s5, %s3
  $region1: #{tpu_custom_call.1} parent=0
    #allocation2 [shape = 'u8[8192]{0}', space=vmem, size = 0x2000, scoped, tag = 'input window, operand 0, single buffered']
    #allocation3 [shape = 's32[1]{0}', space=sflag, size = 0x4, scoped, tag = 'scoped memory for tpu_custom_call.1']
    #allocation4 [shape = 's32[1]{0}', space=sflag, size = 0x4, scoped, tag = 'scoped memory for tpu_custom_call.1']
    #allocation5 [shape = 'u8[8192]{0}', space=vmem, size = 0x2000, scoped, tag = 'input window, operand 1, single buffered']
    #allocation6 [shape = 's32[1]{0}', space=sflag, size = 0x4, scoped, tag = 'scoped memory for tpu_custom_call.1']
    #allocation7 [shape = 'u8[16384]{0}', space=vmem, size = 0x4000, scoped, tag = 'output window, operand 0, single buffered']
    %7 = vsyncpa [#allocation3], 0
    %8 = vsyncpa [#allocation6], 0
    %9 = vsyncpa [#allocation4], 0
    // Predicated region
    $region2: #{tpu_custom_call.1} parent=1 // pred_check
      _
    $region3: #{tpu_custom_call.1} parent=1 // pred_check_branch
      %11 = sbr.rel (0) target = $region5
    $region4: #{tpu_custom_call.1} parent=1 // pred_region
      %s12 = sadd.s32 0, 0
      %p13 = scmp.lt.s32.totalorder %s12, 0
      %s14 = scalar_select %p13, %s12, 0
      %s15 = smul.u32 2, %s14
      %s17 = ssub.s32 256, 256
      %18 = vsyncadd [#allocation3], %s17
      %s19 = smul.addr %s15, 128
      %s20 = scalar_lea.hbm %s0, %s19
      %s21 = sshll.u32 [#allocation2], 4
      %s22 = int_to_ptr.vmem [resolvable:$true] %s21
      %27 = dma.hbm_to_vmem [thread:$0]  %s20, 256, %s22, [#allocation3], 128, 128, 8
    $region5: #{tpu_custom_call.1} parent=1 // pred_fallthru
      _
    // Predicated region
    $region6: #{tpu_custom_call.1} parent=1 // pred_check
      _
    $region7: #{tpu_custom_call.1} parent=1 // pred_check_branch
      %29 = sbr.rel (0) target = $region9
    $region8: #{tpu_custom_call.1} parent=1 // pred_region
      %s30 = sadd.s32 0, 0
      %p31 = scmp.lt.s32.totalorder %s30, 0
      %s32 = scalar_select %p31, %s30, 0
      %s33 = smul.u32 2, %s32
      %s35 = ssub.s32 256, 256
      %36 = vsyncadd [#allocation6], %s35
      %s37 = smul.addr %s33, 128
      %s38 = scalar_lea.hbm %s1, %s37
      %s39 = sshll.u32 [#allocation5], 4
      %s40 = int_to_ptr.vmem [resolvable:$true] %s39
      %45 = dma.hbm_to_vmem [thread:$0]  %s38, 256, %s40, [#allocation6], 128, 128, 8
    $region9: #{tpu_custom_call.1} parent=1 // pred_fallthru
      _
    // Predicated region
    $region10: #{tpu_custom_call.1} parent=1 // pred_check
      _
    $region11: #{tpu_custom_call.1} parent=1 // pred_check_branch
      %47 = sbr.rel (0) target = $region13
    $region12: #{tpu_custom_call.1} parent=1 // pred_region
      %48 = dma.done [#allocation3], 256
    $region13: #{tpu_custom_call.1} parent=1 // pred_fallthru
      _
    // Predicated region
    $region14: #{tpu_custom_call.1} parent=1 // pred_check
      _
    $region15: #{tpu_custom_call.1} parent=1 // pred_check_branch
      %50 = sbr.rel (0) target = $region17
    $region16: #{tpu_custom_call.1} parent=1 // pred_region
      %51 = dma.done [#allocation6], 256
    $region17: #{tpu_custom_call.1} parent=1 // pred_fallthru
      _
    %s52 = sadd.s32 0, 0
    %p53 = scmp.lt.s32.totalorder %s52, 0
    %s54 = scalar_select %p53, %s52, 0
    %s55 = smul.u32 2, %s54
    %s56 = sadd.s32 0, 0
    %p57 = scmp.lt.s32.totalorder %s56, 0
    %s58 = scalar_select %p57, %s56, 0
    %s59 = smul.u32 2, %s58
    %p60 = scmp.eq.s32.totalorder 0, 0
    // Predicated region
    $region18: #{tpu_custom_call.1} parent=1 // pred_check
      %p61 = pneg %p60
    $region19: #{tpu_custom_call.1} parent=1 // pred_check_branch
      %63 = sbr.rel (%p61) target = $region21
    $region20: #{tpu_custom_call.1} parent=1 // pred_region
      %64 = vst [vmem:[#allocation7] sm:$0xff] 0.0
      %65 = vst [vmem:[#allocation7 + $0x8] sm:$0xff] 0.0
      %66 = vst [vmem:[#allocation7 + $0x10] sm:$0xff] 0.0
      %67 = vst [vmem:[#allocation7 + $0x18] sm:$0xff] 0.0
    $region21: #{tpu_custom_call.1} parent=1 // pred_fallthru
      _
    %s68 = sadd.s32 0, 0
    %s69 = smul.u32 %s68, 2048
    %v70 = vlaneseq
    %v71 = vshrl.u32 %v70, 7
    %v72 = vmul.u32 %v71, 128
    %v73 = vlaneseq
    %v74 = vand.u32 %v73, 127
    %v75 = vadd.s32 %v72, %v74
    %v76 = vld [vmem:[#allocation2] sm:$0xff]
    %v77 = vld [vmem:[#allocation5] sm:$0xff]
    %s78 = ssub.s32 2048, %s69
    %s79 = smul.u32 0, 128
    %s80 = ssub.s32 %s78, %s79
    %v81 = vstv %s80
    %vm82 = vcmp.lt.s32.totalorder %v75, %v81
    %v83 = vsel %vm82, %v76, 0.0
    %v84 = vsel %vm82, %v77, 0.0
    %v85 = vmax.f32 %v83, 1e-06
    %v86 = vmin.f32 %v85, 0.999999
    %v87 = vlog2.pop %v86
    %v88 = vmul.f32 %v87, 0.6931472
    %v89 = vmul.f32 %v84, %v88
    %v90 = vmul.f32 %v89, 0.5
    %v91 = vsub.f32 1.0, %v84
    %v92 = vmul.f32 %v91, 0.5
    %v93 = vsub.f32 1.0, %v86
    %v94 = vlog2.pop %v93
    %v95 = vmul.f32 %v94, 0.6931472
    %v96 = vmul.f32 %v92, %v95
    %v97 = vadd.f32 %v90, %v96
    %v98 = vsub.f32 0.0, %v97
    %v99 = vsel %vm82, %v98, 0.0
    %v100 = vmul.f32 %v83, %v84
    %v101 = vadd.f32 %v100, 0.0
    %v102 = vadd.f32 %v83, 0.0
    %v103 = vadd.f32 %v84, 0.0
    %v104 = vadd.f32 %v99, 0.0
    %s105 = scalar_lea.vmem [#allocation2], 8
    %v106 = vld [vmem:[%s105] sm:$0xff]
    %s107 = scalar_lea.vmem [#allocation5], 8
    %v108 = vld [vmem:[%s107] sm:$0xff]
    %s109 = smul.u32 8, 128
    %s110 = ssub.s32 %s78, %s109
    %v111 = vstv %s110
    %vm112 = vcmp.lt.s32.totalorder %v75, %v111
    %v113 = vsel %vm112, %v106, 0.0
    %v114 = vsel %vm112, %v108, 0.0
    %v115 = vmax.f32 %v113, 1e-06
    %v116 = vmin.f32 %v115, 0.999999
    %v117 = vlog2.pop %v116
    %v118 = vmul.f32 %v117, 0.6931472
    %v119 = vmul.f32 %v114, %v118
    %v120 = vmul.f32 %v119, 0.5
    %v121 = vsub.f32 1.0, %v114
    %v122 = vmul.f32 %v121, 0.5
    %v123 = vsub.f32 1.0, %v116
    %v124 = vlog2.pop %v123
    %v125 = vmul.f32 %v124, 0.6931472
    %v126 = vmul.f32 %v122, %v125
    %v127 = vadd.f32 %v120, %v126
    %v128 = vsub.f32 0.0, %v127
    %v129 = vsel %vm112, %v128, 0.0
    %v130 = vmul.f32 %v113, %v114
    %v131 = vadd.f32 %v101, %v130
    %v132 = vadd.f32 %v102, %v113
    %v133 = vadd.f32 %v103, %v114
    %v134 = vadd.f32 %v104, %v129
    %v135 = vld [vmem:[#allocation7] sm:$0xff]
    %v136 = vadd.f32 %v135, %v131
    %137 = vst [vmem:[#allocation7] sm:$0xff] %v136
    %s138 = scalar_lea.vmem [#allocation7], 8
    %v139 = vld [vmem:[%s138] sm:$0xff]
    %v140 = vadd.f32 %v139, %v132
    %141 = vst [vmem:[%s138] sm:$0xff] %v140
    %s142 = scalar_lea.vmem [#allocation7], 16
    %v143 = vld [vmem:[%s142] sm:$0xff]
    %v144 = vadd.f32 %v143, %v133
    %145 = vst [vmem:[%s142] sm:$0xff] %v144
    %s146 = scalar_lea.vmem [#allocation7], 24
    %v147 = vld [vmem:[%s146] sm:$0xff]
    %v148 = vadd.f32 %v147, %v134
    %149 = vst [vmem:[%s146] sm:$0xff] %v148
    // Predicated region
    $region22: #{tpu_custom_call.1} parent=1 // pred_check
      _
    $region23: #{tpu_custom_call.1} parent=1 // pred_check_branch
      %151 = sbr.rel (0) target = $region25
    $region24: #{tpu_custom_call.1} parent=1 // pred_region
      %s153 = ssub.s32 512, 512
      %154 = vsyncadd [#allocation4], %s153
      %s155 = sshll.u32 [#allocation7], 4
      %s156 = int_to_ptr.vmem [resolvable:$true] %s155
      %161 = dma.vmem_to_hbm [thread:$0]  %s156, 512, %s2, [#allocation4], 128, 128, 8
    $region25: #{tpu_custom_call.1} parent=1 // pred_fallthru
      _
    // Predicated region
    $region26: #{tpu_custom_call.1} parent=1 // pred_check
      _
    $region27: #{tpu_custom_call.1} parent=1 // pred_check_branch
      %163 = sbr.rel (0) target = $region29
    $region28: #{tpu_custom_call.1} parent=1 // pred_region
      %164 = dma.done [#allocation4], 512
    $region29: #{tpu_custom_call.1} parent=1 // pred_fallthru
      _
    %165 = vsyncpa [#allocation3], 1
    %166 = vsyncpa [#allocation6], 1
    %167 = vsyncpa [#allocation4], 1

</llo_original>
